<compile_context>
chip_gen: v7x
topology: tpu7x:2x2x1
jax: 0.10.0
libtpu: 0.0.40
codegen_flags: <defaults>
</compile_context>

<pallas_src>
import functools
import math

import jax
import jax.numpy as jnp
from jax import lax
from jax.experimental import pallas as pl
from jax.experimental.pallas import tpu as pltpu


_VMEM_WORKING_SET_BUDGET = 48 << 20   # conservative: fits v7x's 64 MiB physical VMEM


def _round_up(x, m):
    return ((x + m - 1) // m) * m


def _fc_kernel(x_ref, w_ref, *rest, weight_gain, bias_gain, activation,
               has_bias, single_k, cast_w, precision):
    """One (tm, tn) output tile of  y = (x @ w.T) * weight_gain + b * bias_gain.

    x_ref:   (tm, tk)          activation tile
    w_ref:   (tn, tk)          weight tile, original (out, in) layout
    b_ref:   (1, tn)           only if has_bias
    o_ref:   (tm, tn)          output tile
    acc_ref: (tm, tn) f32      only if not single_k; resident across the K axis
    """
    idx = 0
    if has_bias:
        b_ref = rest[idx]
        idx += 1
    o_ref = rest[idx]
    idx += 1
    acc_ref = None if single_k else rest[idx]

    x = x_ref[...]
    w = w_ref[...]
    if cast_w:
        w = w.astype(x.dtype)

    # Contract the K (last) dims of both operands -> (tm, tn).  No transpose is
    # materialised anywhere; the MXU consumes this layout directly.
    part = lax.dot_general(
        x, w,
        dimension_numbers=(((1,), (1,)), ((), ())),
        preferred_element_type=jnp.float32,
        precision=precision,
    )

    def _epilogue(acc):
        acc = acc * weight_gain                      # scalar gain after MXU, in f32
        if has_bias:
            acc = acc + b_ref[...].astype(jnp.float32) * bias_gain
        if activation == "linear":
            pass
        elif activation == "relu":
            acc = jnp.maximum(acc, 0.0) * math.sqrt(2.0)
        elif activation == "lrelu":
            acc = jnp.where(acc >= 0.0, acc, 0.2 * acc) * math.sqrt(2.0)
        else:
            # TODO(synk): other bias_act activations (sigmoid/tanh/swish/...) not wired up.
            raise NotImplementedError(activation)
        o_ref[...] = acc.astype(o_ref.dtype)

    if single_k:
        _epilogue(part)
    else:
        k = pl.program_id(2)

        @pl.when(k == 0)
        def _():
            acc_ref[...] = jnp.zeros_like(acc_ref)

        acc_ref[...] += part

        @pl.when(k == pl.num_programs(2) - 1)
        def _():
            _epilogue(acc_ref[...])


def fully_connected_layer(x, weight, bias, *, lr_multiplier=1.0,
                          activation="linear", compute_dtype=None,
                          precision=None, tm_max=512, tn_max=512, tk_max=1024,
                          weight_buffer_count=None):
    """Pallas TPU implementation of FullyConnectedLayer.forward.

    x:      (N, in_features)
    weight: (out_features, in_features)  -- kept in this layout, never transposed
    bias:   (out_features,) or None
    compute_dtype: optional (e.g. jnp.bfloat16) opt-in MXU dtype; f32 accumulate.
    """
    N, in_features = x.shape
    out_features, wk = weight.shape
    assert wk == in_features, "weight must be (out_features, in_features)"

    out_dtype = x.dtype
    if compute_dtype is not None and x.dtype != compute_dtype:
        x = x.astype(compute_dtype)       # opt-in bf16 (etc.) MXU path

    weight_gain = lr_multiplier / math.sqrt(in_features)
    bias_gain = lr_multiplier
    has_bias = bias is not None
    cast_w = weight.dtype != x.dtype      # weight tiles cast in-kernel if needed

    if precision is None:
        # full-f32 MXU passes for f32 inputs (matches torch semantics);
        # irrelevant for bf16 compute.
        precision = (lax.Precision.HIGHEST if x.dtype == jnp.float32
                     else lax.Precision.DEFAULT)

    bytes_x = jnp.dtype(x.dtype).itemsize
    bytes_w = jnp.dtype(weight.dtype).itemsize
    bytes_o = jnp.dtype(out_dtype).itemsize

    # ---- tile sizing (lane = 128; sublane = 8, 16 for bf16 rows) -----------
    sub = 16 if x.dtype == jnp.bfloat16 else 8

    k_pad0 = _round_up(in_features, 128)
    tk = min(_round_up(tk_max, 128), k_pad0)

    out_pad0 = _round_up(out_features, 128)
    tn = min(_round_up(tn_max, 128), out_pad0)

    # rows: avoid large zero-row waste while keeping sublane alignment
    n_sub = _round_up(N, sub)
    if n_sub <= tm_max:
        tm = n_sub                                   # single row block, minimal pad
    else:
        tm = _round_up(tm_max, sub)
        floor_tm = max(sub, min(64, tm))
        while tm > floor_tm:
            n_pad_try = _round_up(N, tm)
            if (n_pad_try - N) * 8 <= n_pad_try:     # <=12.5% padded rows: accept
                break
            tm = _round_up(max(floor_tm, tm // 2), sub)

    n_pad = _round_up(N, tm)
    out_pad = _round_up(out_pad0, tn)
    k_pad = _round_up(k_pad0, tk)

    # v7x megacore: give the 2 TensorCores >=2 blocks on a parallel axis.
    if (n_pad // tm) * (out_pad // tn) < 2 and out_pad >= 256:
        half = out_pad // 2
        tn = half if half % 128 == 0 else 128
        out_pad = _round_up(out_pad0, tn)

    # ---- VMEM budget: 2x(x) + 2x(w) + 2x(out) + f32 acc + bias -------------
    def working_set(tm_, tn_, tk_, single_k_):
        ws = (2 * tm_ * tk_ * bytes_x + 2 * tn_ * tk_ * bytes_w
              + 2 * tm_ * tn_ * bytes_o)
        if not single_k_:
            ws += tm_ * tn_ * 4
        if has_bias:
            ws += 2 * tn_ * 4
        return ws

    while working_set(tm, tn, tk, k_pad // tk == 1) > _VMEM_WORKING_SET_BUDGET:
        if tk > 128:
            tk = _round_up(tk // 2, 128)
        elif tn > 128:
            tn = _round_up(tn // 2, 128)
        elif tm > sub:
            tm = _round_up(max(sub, tm // 2), sub)
        else:
            break
        k_pad = _round_up(k_pad0, tk)
        out_pad = _round_up(out_pad0, tn)
        n_pad = _round_up(N, tm)

    single_k = (k_pad // tk) == 1

    # ---- wrapper-side padding (no-ops when shapes are already aligned) -----
    x_p = x
    if (n_pad, k_pad) != (N, in_features):
        x_p = jnp.pad(x, ((0, n_pad - N), (0, k_pad - in_features)))

    w_p = weight
    if (out_pad, k_pad) != (out_features, in_features):
        w_p = jnp.pad(weight, ((0, out_pad - out_features), (0, k_pad - in_features)))

    if has_bias:
        b2d = bias.reshape(1, out_features)
        if out_pad != out_features:
            b2d = jnp.pad(b2d, ((0, 0), (0, out_pad - out_features)))

    # ---- grid / specs -------------------------------------------------------
    if single_k:
        grid = (n_pad // tm, out_pad // tn)
        x_map = lambda i, j: (i, 0)
        w_map = lambda i, j: (j, 0)
        b_map = lambda i, j: (0, j)
        o_map = lambda i, j: (i, j)
        scratch_shapes = []
        dim_sem = ("parallel", "parallel")
    else:
        grid = (n_pad // tm, out_pad // tn, k_pad // tk)
        x_map = lambda i, j, k: (i, k)
        w_map = lambda i, j, k: (j, k)
        b_map = lambda i, j, k: (0, j)
        o_map = lambda i, j, k: (i, j)
        scratch_shapes = [pltpu.VMEM((tm, tn), jnp.float32)]
        dim_sem = ("parallel", "parallel", "arbitrary")

    w_spec_kwargs = {}
    if weight_buffer_count is not None:
        # opt-in deeper buffering for the weight-streaming (small-N) regime
        w_spec_kwargs["pipeline_mode"] = pl.Buffered(weight_buffer_count)

    in_specs = [pl.BlockSpec((tm, tk), x_map),
                pl.BlockSpec((tn, tk), w_map, **w_spec_kwargs)]
    args = [x_p, w_p]
    if has_bias:
        in_specs.append(pl.BlockSpec((1, tn), b_map))
        args.append(b2d)

    kernel = functools.partial(
        _fc_kernel,
        weight_gain=float(weight_gain),
        bias_gain=float(bias_gain),
        activation=activation,
        has_bias=has_bias,
        single_k=single_k,
        cast_w=cast_w,
        precision=precision,
    )

    ws = working_set(tm, tn, tk, single_k)
    vmem_limit = int(min(56 << 20, max(32 << 20, ws + (8 << 20))))

    flops = 2 * n_pad * k_pad * out_pad
    bytes_accessed = (n_pad * k_pad * bytes_x + out_pad * k_pad * bytes_w
                      + n_pad * out_pad * bytes_o
                      + (out_pad * 4 if has_bias else 0))

    out = pl.pallas_call(
        kernel,
        out_shape=jax.ShapeDtypeStruct((n_pad, out_pad), out_dtype),
        grid_spec=pltpu.PrefetchScalarGridSpec(
            num_scalar_prefetch=0,
            grid=grid,
            in_specs=in_specs,
            out_specs=pl.BlockSpec((tm, tn), o_map),
            scratch_shapes=scratch_shapes,
        ),
        compiler_params=pltpu.CompilerParams(
            dimension_semantics=dim_sem,
            vmem_limit_bytes=vmem_limit,
        ),
        cost_estimate=pl.CostEstimate(flops=flops, transcendentals=0,
                                      bytes_accessed=bytes_accessed),
    )(*args)

    if (n_pad, out_pad) != (N, out_features):
        out = out[:N, :out_features]
    return out


def _reference(x, weight, bias, *, lr_multiplier=1.0, activation="linear"):
    weight_gain = lr_multiplier / math.sqrt(x.shape[1])
    w = weight.astype(x.dtype) * weight_gain
    y = jnp.matmul(x, w.T, precision=lax.Precision.HIGHEST)
    if bias is not None:
        y = y + (bias.astype(x.dtype) * lr_multiplier)[None, :]
    if activation == "relu":
        y = jnp.maximum(y, 0.0) * math.sqrt(2.0)
    elif activation == "lrelu":
        y = jnp.where(y >= 0.0, y, 0.2 * y) * math.sqrt(2.0)
    return y


if __name__ == "__main__":
    key = jax.random.PRNGKey(0)
    k1, k2, k3, k4, k5, k6 = jax.random.split(key, 6)

    # ---- case 1: small mapping-network style layer, linear + bias ----------
    # single K step, single grid block
    N, K, O = 8, 32, 32
    lr = 0.01
    x = jax.random.normal(k1, (N, K), dtype=jnp.float32)
    w = jax.random.normal(k2, (O, K), dtype=jnp.float32) / lr   # randn/lr init
    b = jnp.zeros((O,), dtype=jnp.float32)

    y = fully_connected_layer(x, w, b, lr_multiplier=lr, activation="linear")
    y = jax.block_until_ready(y)
    y_ref = _reference(x, w, b, lr_multiplier=lr, activation="linear")
    assert y.shape == (N, O)
    assert jnp.allclose(y, y_ref, atol=1e-4, rtol=1e-4), "mismatch (linear+bias)"

    # ---- case 2: multi-K accumulation, non-aligned dims, no bias, lrelu ----
    # forces grid (2, 1, 2): exercises the acc init/finalize path + padding
    N2, K2, O2 = 50, 200, 48
    x2 = jax.random.normal(k3, (N2, K2), dtype=jnp.float32)
    w2 = jax.random.normal(k4, (O2, K2), dtype=jnp.float32)
    y2 = fully_connected_layer(x2, w2, None, lr_multiplier=1.0,
                               activation="lrelu",
                               tm_max=32, tn_max=128, tk_max=128)
    y2 = jax.block_until_ready(y2)
    y2_ref = _reference(x2, w2, None, lr_multiplier=1.0, activation="lrelu")
    assert y2.shape == (N2, O2)
    assert jnp.allclose(y2, y2_ref, atol=2e-4, rtol=2e-4), "mismatch (lrelu, multi-K)"

    # ---- case 3: opt-in bf16 compute path, relu + bias ----------------------
    N3, K3, O3 = 16, 256, 128
    x3 = jax.random.normal(k5, (N3, K3), dtype=jnp.float32)
    w3 = jax.random.normal(k6, (O3, K3), dtype=jnp.float32)
    b3 = jnp.full((O3,), 0.1, dtype=jnp.float32)
    y3 = fully_connected_layer(x3, w3, b3, lr_multiplier=1.0, activation="relu",
                               compute_dtype=jnp.bfloat16)
    y3 = jax.block_until_ready(y3)
    y3_ref = _reference(x3.astype(jnp.bfloat16).astype(jnp.float32),
                        w3.astype(jnp.bfloat16).astype(jnp.float32),
                        b3, lr_multiplier=1.0, activation="relu")
    assert y3.shape == (N3, O3)
    assert y3.dtype == jnp.float32
    assert jnp.allclose(y3, y3_ref, atol=2e-2, rtol=2e-2), "mismatch (bf16 relu)"

    print("KERNEL_OK")
</pallas_src>

<mosaic_0001>
module attributes {stable_mosaic.version = 11 : i64} {
  func.func @_fc_kernel(%arg0: i32, %arg1: i32, %arg2: memref<8x128xf32, #tpu.memory_space<vmem>>, %arg3: memref<128x128xf32, #tpu.memory_space<vmem>>, %arg4: memref<1x128xf32, #tpu.memory_space<vmem>>, %arg5: memref<8x128xf32, #tpu.memory_space<vmem>>) attributes {dimension_semantics = [#tpu.dimension_semantics<parallel>, #tpu.dimension_semantics<parallel>], iteration_bounds = array<i64: 1, 1>, scalar_prefetch = 0 : i64, scratch_operands = 0 : i64, tpu.core_type = #tpu.core_type<tc>, window_params = [{transform_indices = @transform_0, window_bounds = array<i64: 8, 128>}, {transform_indices = @transform_1, window_bounds = array<i64: 128, 128>}, {transform_indices = @transform_2, window_bounds = array<i64: 1, 128>}, {transform_indices = @transform_3, window_bounds = array<i64: 8, 128>}]} {
    %c0 = arith.constant 0 : index
    %c0_0 = arith.constant 0 : index
    %0 = vector.load %arg2[%c0, %c0_0] : memref<8x128xf32, #tpu.memory_space<vmem>>, vector<8x128xf32>
    %c0_1 = arith.constant 0 : index
    %c0_2 = arith.constant 0 : index
    %1 = vector.load %arg3[%c0_1, %c0_2] : memref<128x128xf32, #tpu.memory_space<vmem>>, vector<128x128xf32>
    %cst = arith.constant dense<0.000000e+00> : vector<8x128xf32>
    %2 = tpu.matmul %0, %1, %cst {dimension_numbers = #tpu.dot_dimension_numbers<[1], [1], [0], [0], [0, 0, 1, 0], [], []>, precision = #tpu.contract_precision<fp32>} : vector<8x128xf32>, vector<128x128xf32>, vector<8x128xf32> -> vector<8x128xf32>
    %cst_3 = arith.constant 0.00176776689 : f32
    %3 = vector.broadcast %cst_3 : f32 to vector<8x128xf32>
    %4 = arith.mulf %2, %3 : vector<8x128xf32>
    %c0_4 = arith.constant 0 : index
    %c0_5 = arith.constant 0 : index
    %5 = vector.load %arg4[%c0_4, %c0_5] : memref<1x128xf32, #tpu.memory_space<vmem>>, vector<1x128xf32>
    %cst_6 = arith.constant 0.00999999977 : f32
    %6 = vector.broadcast %cst_6 : f32 to vector<1x128xf32>
    %7 = arith.mulf %5, %6 : vector<1x128xf32>
    %8 = vector.broadcast %7 : vector<1x128xf32> to vector<8x128xf32>
    %9 = arith.addf %4, %8 : vector<8x128xf32>
    %c0_7 = arith.constant 0 : index
    %c0_8 = arith.constant 0 : index
    %10 = vector.load %arg5[%c0_7, %c0_8] : memref<8x128xf32, #tpu.memory_space<vmem>>, vector<8x128xf32>
    tpu.vector_store %arg5[%c0_7, %c0_8], %9 {strides = array<i32>} : memref<8x128xf32, #tpu.memory_space<vmem>>, vector<8x128xf32>,
    return
  }
  func.func @transform_0(%arg0: i32, %arg1: i32) -> (i32, i32) {
    %c0_i32 = arith.constant 0 : i32
    %c0_i32_0 = arith.constant 0 : i32
    return %arg0, %c0_i32 : i32, i32
  }
  func.func @transform_1(%arg0: i32, %arg1: i32) -> (i32, i32) {
    %c0_i32 = arith.constant 0 : i32
    %c0_i32_0 = arith.constant 0 : i32
    return %arg1, %c0_i32 : i32, i32
  }
  func.func @transform_2(%arg0: i32, %arg1: i32) -> (i32, i32) {
    %c0_i32 = arith.constant 0 : i32
    %c0_i32_0 = arith.constant 0 : i32
    return %c0_i32, %arg1 : i32, i32
  }
  func.func @transform_3(%arg0: i32, %arg1: i32) -> (i32, i32) {
    %c0_i32 = arith.constant 0 : i32
    return %arg0, %arg1 : i32, i32
  }
}

</mosaic_0001>

<llo_original>
// kernel: tpu_custom_call.1
$region0: #{tpu_custom_call.1}
  #allocation0 [shape = 'u32[]', space=smem, size = 0x4, offset = 0x4, fixed_abs, tag = 'smem constant byte address 0x4 - core index']
  #allocation1 [shape = 'u32[144,128]{1,0:T(1,128)}', space=vmem, size = 0x12000, scoped, tag = 'internal scratch']
  %s0 = inlined_call_operand.hbm [shape: f32[8,128], index: 0, kind: input, shape index: {}]
  %s1 = inlined_call_operand.hbm [shape: f32[128,128], index: 1, kind: input, shape index: {}]
  %s2 = inlined_call_operand.vmem [shape: f32[1,128], index: 2, kind: input, shape index: {}]
  %s3 = inlined_call_operand.hbm [shape: f32[8,128], index: 3, kind: output, shape index: {}]
  %s4 = sld [smem:[#allocation0]]
  $region30: #{tpu_custom_call.1} parent=0
    _
  %s6 = ssub.s32 1, %s4
  %s7 = scalar_select 0, %s6, %s4
  $region1: #{tpu_custom_call.1} parent=0
    #allocation2 [shape = 'u8[4096]{0}', space=vmem, size = 0x1000, scoped, tag = 'input window, operand 0, single buffered']
    #allocation3 [shape = 's32[1]{0}', space=sflag, size = 0x4, scoped, tag = 'scoped memory for tpu_custom_call.1']
    #allocation4 [shape = 's32[1]{0}', space=sflag, size = 0x4, scoped, tag = 'scoped memory for tpu_custom_call.1']
    #allocation5 [shape = 'u8[65536]{0}', space=vmem, size = 0x10000, scoped, tag = 'input window, operand 1, single buffered']
    #allocation6 [shape = 's32[1]{0}', space=sflag, size = 0x4, scoped, tag = 'scoped memory for tpu_custom_call.1']
    #allocation7 [shape = 'u8[4096]{0}', space=vmem, size = 0x1000, scoped, tag = 'output window, operand 0, single buffered']
    %8 = vsyncpa [#allocation3], 0
    %9 = vsyncpa [#allocation6], 0
    %10 = vsyncpa [#allocation4], 0
    // Predicated region
    $region2: #{tpu_custom_call.1} parent=1 // pred_check
      _
    $region3: #{tpu_custom_call.1} parent=1 // pred_check_branch
      %12 = sbr.rel (0) target = $region5
    $region4: #{tpu_custom_call.1} parent=1 // pred_region
      %s14 = ssub.s32 128, 128
      %15 = vsyncadd [#allocation3], %s14
      %s17 = sshll.u32 [#allocation2], 4
      %s18 = int_to_ptr.vmem [resolvable:$true] %s17
      %20 = dma.hbm_to_vmem [thread:$0]  %s0, 128, %s18, [#allocation3]
    $region5: #{tpu_custom_call.1} parent=1 // pred_fallthru
      _
    // Predicated region
    $region6: #{tpu_custom_call.1} parent=1 // pred_check
      _
    $region7: #{tpu_custom_call.1} parent=1 // pred_check_branch
      %22 = sbr.rel (0) target = $region9
    $region8: #{tpu_custom_call.1} parent=1 // pred_region
      %s24 = ssub.s32 2048, 2048
      %25 = vsyncadd [#allocation6], %s24
      %s26 = sshll.u32 [#allocation5], 4
      %s27 = int_to_ptr.vmem [resolvable:$true] %s26
      %32 = dma.hbm_to_vmem [thread:$0]  %s1, 2048, %s27, [#allocation6], 128, 128, 8
    $region9: #{tpu_custom_call.1} parent=1 // pred_fallthru
      _
    // Predicated region
    $region10: #{tpu_custom_call.1} parent=1 // pred_check
      _
    $region11: #{tpu_custom_call.1} parent=1 // pred_check_branch
      %34 = sbr.rel (0) target = $region13
    $region12: #{tpu_custom_call.1} parent=1 // pred_region
      _
    $region13: #{tpu_custom_call.1} parent=1 // pred_fallthru
      _
    // Predicated region
    $region14: #{tpu_custom_call.1} parent=1 // pred_check
      _
    $region15: #{tpu_custom_call.1} parent=1 // pred_check_branch
      %36 = sbr.rel (0) target = $region17
    $region16: #{tpu_custom_call.1} parent=1 // pred_region
      %37 = dma.done [#allocation3], 128
    $region17: #{tpu_custom_call.1} parent=1 // pred_fallthru
      _
    // Predicated region
    $region18: #{tpu_custom_call.1} parent=1 // pred_check
      _
    $region19: #{tpu_custom_call.1} parent=1 // pred_check_branch
      %39 = sbr.rel (0) target = $region21
    $region20: #{tpu_custom_call.1} parent=1 // pred_region
      %40 = dma.done [#allocation6], 2048
    $region21: #{tpu_custom_call.1} parent=1 // pred_fallthru
      _
    %v41 = vld [vmem:[#allocation2] sm:$0xff]
    %v42 = vld [vmem:[#allocation5] sm:$0xff]
    %v43 = vld [vmem:[#allocation5 + $0x8] sm:$0xff]
    %v44 = vld [vmem:[#allocation5 + $0x10] sm:$0xff]
    %v45 = vld [vmem:[#allocation5 + $0x18] sm:$0xff]
    %v46 = vld [vmem:[#allocation5 + $0x20] sm:$0xff]
    %v47 = vld [vmem:[#allocation5 + $0x28] sm:$0xff]
    %v48 = vld [vmem:[#allocation5 + $0x30] sm:$0xff]
    %v49 = vld [vmem:[#allocation5 + $0x38] sm:$0xff]
    %v50 = vld [vmem:[#allocation5 + $0x40] sm:$0xff]
    %v51 = vld [vmem:[#allocation5 + $0x48] sm:$0xff]
    %v52 = vld [vmem:[#allocation5 + $0x50] sm:$0xff]
    %v53 = vld [vmem:[#allocation5 + $0x58] sm:$0xff]
    %v54 = vld [vmem:[#allocation5 + $0x60] sm:$0xff]
    %v55 = vld [vmem:[#allocation5 + $0x68] sm:$0xff]
    %v56 = vld [vmem:[#allocation5 + $0x70] sm:$0xff]
    %v57 = vld [vmem:[#allocation5 + $0x78] sm:$0xff]
    %58 = vmatprep.subr.mxu0 0.0
    %v59 = vand.u32 %v42, 4294901760
    %60 = vmatpush1.xpose.msra.mxu0 %v59
    %61 = vmatprep.subr.mxu0 0.0
    %v62 = vand.u32 %v43, 4294901760
    %63 = vmatpush1.xpose.msra.mxu0 %v62
    %64 = vmatprep.subr.mxu0 0.0
    %v65 = vand.u32 %v44, 4294901760
    %66 = vmatpush1.xpose.msra.mxu0 %v65
    %67 = vmatprep.subr.mxu0 0.0
    %v68 = vand.u32 %v45, 4294901760
    %69 = vmatpush1.xpose.msra.mxu0 %v68
    %70 = vmatprep.subr.mxu0 0.0
    %v71 = vand.u32 %v46, 4294901760
    %72 = vmatpush1.xpose.msra.mxu0 %v71
    %73 = vmatprep.subr.mxu0 0.0
    %v74 = vand.u32 %v47, 4294901760
    %75 = vmatpush1.xpose.msra.mxu0 %v74
    %76 = vmatprep.subr.mxu0 0.0
    %v77 = vand.u32 %v48, 4294901760
    %78 = vmatpush1.xpose.msra.mxu0 %v77
    %79 = vmatprep.subr.mxu0 0.0
    %v80 = vand.u32 %v49, 4294901760
    %81 = vmatpush1.xpose.msra.mxu0 %v80
    %82 = vmatprep.subr.mxu0 0.0
    %v83 = vand.u32 %v50, 4294901760
    %84 = vmatpush1.xpose.msra.mxu0 %v83
    %85 = vmatprep.subr.mxu0 0.0
    %v86 = vand.u32 %v51, 4294901760
    %87 = vmatpush1.xpose.msra.mxu0 %v86
    %88 = vmatprep.subr.mxu0 0.0
    %v89 = vand.u32 %v52, 4294901760
    %90 = vmatpush1.xpose.msra.mxu0 %v89
    %91 = vmatprep.subr.mxu0 0.0
    %v92 = vand.u32 %v53, 4294901760
    %93 = vmatpush1.xpose.msra.mxu0 %v92
    %94 = vmatprep.subr.mxu0 0.0
    %v95 = vand.u32 %v54, 4294901760
    %96 = vmatpush1.xpose.msra.mxu0 %v95
    %97 = vmatprep.subr.mxu0 0.0
    %v98 = vand.u32 %v55, 4294901760
    %99 = vmatpush1.xpose.msra.mxu0 %v98
    %100 = vmatprep.subr.mxu0 0.0
    %v101 = vand.u32 %v56, 4294901760
    %102 = vmatpush1.xpose.msra.mxu0 %v101
    %103 = vmatprep.subr.mxu0 0.0
    %v104 = vand.u32 %v57, 4294901760
    %105 = vmatpush1.xpose.msra.mxu0 %v104
    %106 = vmatprep.subr.mxu0 0.0
    %107 = vmatpush1.xpose.msra.mxu0 0.0
    %108 = vmatprep.subr.mxu0 0.0
    %109 = vmatpush1.xpose.msra.mxu0 0.0
    %110 = vmatprep.subr.mxu0 0.0
    %111 = vmatpush1.xpose.msra.mxu0 0.0
    %112 = vmatprep.subr.mxu0 0.0
    %113 = vmatpush1.xpose.msra.mxu0 0.0
    %114 = vmatprep.subr.mxu0 0.0
    %115 = vmatpush1.xpose.msra.mxu0 0.0
    %116 = vmatprep.subr.mxu0 0.0
    %117 = vmatpush1.xpose.msra.mxu0 0.0
    %118 = vmatprep.subr.mxu0 0.0
    %119 = vmatpush1.xpose.msra.mxu0 0.0
    %120 = vmatprep.subr.mxu0 0.0
    %121 = vmatpush1.xpose.msra.mxu0 0.0
    %122 = vmatprep.subr.mxu0 0.0
    %123 = vmatpush1.xpose.msra.mxu0 0.0
    %124 = vmatprep.subr.mxu0 0.0
    %125 = vmatpush1.xpose.msra.mxu0 0.0
    %126 = vmatprep.subr.mxu0 0.0
    %127 = vmatpush1.xpose.msra.mxu0 0.0
    %128 = vmatprep.subr.mxu0 0.0
    %129 = vmatpush1.xpose.msra.mxu0 0.0
    %130 = vmatprep.subr.mxu0 0.0
    %131 = vmatpush1.xpose.msra.mxu0 0.0
    %132 = vmatprep.subr.mxu0 0.0
    %133 = vmatpush1.xpose.msra.mxu0 0.0
    %134 = vmatprep.subr.mxu0 0.0
    %135 = vmatpush1.xpose.msra.mxu0 0.0
    %136 = vmatprep.subr.mxu0 0.0
    %137 = vmatpush1.xpose.msra.mxu0 0.0
    %138 = vmatprep.mubr.f32.mxu0 0.0
    %v139 = vand.u32 %v41, 4294901760
    %v140 = vsub.f32 %v41, %v139
    %v141 = vand.u32 %v140, 4294901760
    %v142 = vsub.f32 %v140, %v141
    %v143 = vand.u32 %v142, 4294901760
    %144 = vmatmul.mubr.f32.gmra.mrb[0].mxu0 %v143
    %v145 = vpop.f32.mrb[0].mxu0
    %v146 = vadd.f32 0.0, %v145
    %v147 = vpop.f32.mrb[0].mxu0
    %148 = vdwg.mxu0
    %149 = vmatprep.subr.mxu0 0.0
    %v150 = vand.u32 %v42, 4294901760
    %v151 = vsub.f32 %v42, %v150
    %v152 = vand.u32 %v151, 4294901760
    %v153 = vsub.f32 %v151, %v152
    %v154 = vand.u32 %v153, 4294901760
    %155 = vmatpush1.xpose.msra.mxu0 %v154
    %156 = vmatprep.subr.mxu0 0.0
    %v157 = vand.u32 %v43, 4294901760
    %v158 = vsub.f32 %v43, %v157
    %v159 = vand.u32 %v158, 4294901760
    %v160 = vsub.f32 %v158, %v159
    %v161 = vand.u32 %v160, 4294901760
    %162 = vmatpush1.xpose.msra.mxu0 %v161
    %163 = vmatprep.subr.mxu0 0.0
    %v164 = vand.u32 %v44, 4294901760
    %v165 = vsub.f32 %v44, %v164
    %v166 = vand.u32 %v165, 4294901760
    %v167 = vsub.f32 %v165, %v166
    %v168 = vand.u32 %v167, 4294901760
    %169 = vmatpush1.xpose.msra.mxu0 %v168
    %170 = vmatprep.subr.mxu0 0.0
    %v171 = vand.u32 %v45, 4294901760
    %v172 = vsub.f32 %v45, %v171
    %v173 = vand.u32 %v172, 4294901760
    %v174 = vsub.f32 %v172, %v173
    %v175 = vand.u32 %v174, 4294901760
    %176 = vmatpush1.xpose.msra.mxu0 %v175
    %177 = vmatprep.subr.mxu0 0.0
    %v178 = vand.u32 %v46, 4294901760
    %v179 = vsub.f32 %v46, %v178
    %v180 = vand.u32 %v179, 4294901760
    %v181 = vsub.f32 %v179, %v180
    %v182 = vand.u32 %v181, 4294901760
    %183 = vmatpush1.xpose.msra.mxu0 %v182
    %184 = vmatprep.subr.mxu0 0.0
    %v185 = vand.u32 %v47, 4294901760
    %v186 = vsub.f32 %v47, %v185
    %v187 = vand.u32 %v186, 4294901760
    %v188 = vsub.f32 %v186, %v187
    %v189 = vand.u32 %v188, 4294901760
    %190 = vmatpush1.xpose.msra.mxu0 %v189
    %191 = vmatprep.subr.mxu0 0.0
    %v192 = vand.u32 %v48, 4294901760
    %v193 = vsub.f32 %v48, %v192
    %v194 = vand.u32 %v193, 4294901760
    %v195 = vsub.f32 %v193, %v194
    %v196 = vand.u32 %v195, 4294901760
    %197 = vmatpush1.xpose.msra.mxu0 %v196
    %198 = vmatprep.subr.mxu0 0.0
    %v199 = vand.u32 %v49, 4294901760
    %v200 = vsub.f32 %v49, %v199
    %v201 = vand.u32 %v200, 4294901760
    %v202 = vsub.f32 %v200, %v201
    %v203 = vand.u32 %v202, 4294901760
    %204 = vmatpush1.xpose.msra.mxu0 %v203
    %205 = vmatprep.subr.mxu0 0.0
    %v206 = vand.u32 %v50, 4294901760
    %v207 = vsub.f32 %v50, %v206
    %v208 = vand.u32 %v207, 4294901760
    %v209 = vsub.f32 %v207, %v208
    %v210 = vand.u32 %v209, 4294901760
    %211 = vmatpush1.xpose.msra.mxu0 %v210
    %212 = vmatprep.subr.mxu0 0.0
    %v213 = vand.u32 %v51, 4294901760
    %v214 = vsub.f32 %v51, %v213
    %v215 = vand.u32 %v214, 4294901760
    %v216 = vsub.f32 %v214, %v215
    %v217 = vand.u32 %v216, 4294901760
    %218 = vmatpush1.xpose.msra.mxu0 %v217
    %219 = vmatprep.subr.mxu0 0.0
    %v220 = vand.u32 %v52, 4294901760
    %v221 = vsub.f32 %v52, %v220
    %v222 = vand.u32 %v221, 4294901760
    %v223 = vsub.f32 %v221, %v222
    %v224 = vand.u32 %v223, 4294901760
    %225 = vmatpush1.xpose.msra.mxu0 %v224
    %226 = vmatprep.subr.mxu0 0.0
    %v227 = vand.u32 %v53, 4294901760
    %v228 = vsub.f32 %v53, %v227
    %v229 = vand.u32 %v228, 4294901760
    %v230 = vsub.f32 %v228, %v229
    %v231 = vand.u32 %v230, 4294901760
    %232 = vmatpush1.xpose.msra.mxu0 %v231
    %233 = vmatprep.subr.mxu0 0.0
    %v234 = vand.u32 %v54, 4294901760
    %v235 = vsub.f32 %v54, %v234
    %v236 = vand.u32 %v235, 4294901760
    %v237 = vsub.f32 %v235, %v236
    %v238 = vand.u32 %v237, 4294901760
    %239 = vmatpush1.xpose.msra.mxu0 %v238
    %240 = vmatprep.subr.mxu0 0.0
    %v241 = vand.u32 %v55, 4294901760
    %v242 = vsub.f32 %v55, %v241
    %v243 = vand.u32 %v242, 4294901760
    %v244 = vsub.f32 %v242, %v243
    %v245 = vand.u32 %v244, 4294901760
    %246 = vmatpush1.xpose.msra.mxu0 %v245
    %247 = vmatprep.subr.mxu0 0.0
    %v248 = vand.u32 %v56, 4294901760
    %v249 = vsub.f32 %v56, %v248
    %v250 = vand.u32 %v249, 4294901760
    %v251 = vsub.f32 %v249, %v250
    %v252 = vand.u32 %v251, 4294901760
    %253 = vmatpush1.xpose.msra.mxu0 %v252
    %254 = vmatprep.subr.mxu0 0.0
    %v255 = vand.u32 %v57, 4294901760
    %v256 = vsub.f32 %v57, %v255
    %v257 = vand.u32 %v256, 4294901760
    %v258 = vsub.f32 %v256, %v257
    %v259 = vand.u32 %v258, 4294901760
    %260 = vmatpush1.xpose.msra.mxu0 %v259
    %261 = vmatprep.subr.mxu0 0.0
    %262 = vmatpush1.xpose.msra.mxu0 0.0
    %263 = vmatprep.subr.mxu0 0.0
    %264 = vmatpush1.xpose.msra.mxu0 0.0
    %265 = vmatprep.subr.mxu0 0.0
    %266 = vmatpush1.xpose.msra.mxu0 0.0
    %267 = vmatprep.subr.mxu0 0.0
    %268 = vmatpush1.xpose.msra.mxu0 0.0
    %269 = vmatprep.subr.mxu0 0.0
    %270 = vmatpush1.xpose.msra.mxu0 0.0
    %271 = vmatprep.subr.mxu0 0.0
    %272 = vmatpush1.xpose.msra.mxu0 0.0
    %273 = vmatprep.subr.mxu0 0.0
    %274 = vmatpush1.xpose.msra.mxu0 0.0
    %275 = vmatprep.subr.mxu0 0.0
    %276 = vmatpush1.xpose.msra.mxu0 0.0
    %277 = vmatprep.subr.mxu0 0.0
    %278 = vmatpush1.xpose.msra.mxu0 0.0
    %279 = vmatprep.subr.mxu0 0.0
    %280 = vmatpush1.xpose.msra.mxu0 0.0
    %281 = vmatprep.subr.mxu0 0.0
    %282 = vmatpush1.xpose.msra.mxu0 0.0
    %283 = vmatprep.subr.mxu0 0.0
    %284 = vmatpush1.xpose.msra.mxu0 0.0
    %285 = vmatprep.subr.mxu0 0.0
    %286 = vmatpush1.xpose.msra.mxu0 0.0
    %287 = vmatprep.subr.mxu0 0.0
    %288 = vmatpush1.xpose.msra.mxu0 0.0
    %289 = vmatprep.subr.mxu0 0.0
    %290 = vmatpush1.xpose.msra.mxu0 0.0
    %291 = vmatprep.subr.mxu0 0.0
    %292 = vmatpush1.xpose.msra.mxu0 0.0
    %293 = vmatprep.mubr.f32.mxu0 0.0
    %v294 = vand.u32 %v41, 4294901760
    %295 = vmatmul.mubr.f32.gmra.mrb[0].mxu0 %v294
    %v296 = vpop.f32.mrb[0].mxu0
    %v297 = vadd.f32 %v146, %v296
    %v298 = vpop.f32.mrb[0].mxu0
    %299 = vdwg.mxu0
    %300 = vmatprep.subr.mxu0 0.0
    %v301 = vand.u32 %v42, 4294901760
    %v302 = vsub.f32 %v42, %v301
    %303 = vmatpush1.xpose.msra.mxu0 %v302
    %304 = vmatprep.subr.mxu0 0.0
    %v305 = vand.u32 %v43, 4294901760
    %v306 = vsub.f32 %v43, %v305
    %307 = vmatpush1.xpose.msra.mxu0 %v306
    %308 = vmatprep.subr.mxu0 0.0
    %v309 = vand.u32 %v44, 4294901760
    %v310 = vsub.f32 %v44, %v309
    %311 = vmatpush1.xpose.msra.mxu0 %v310
    %312 = vmatprep.subr.mxu0 0.0
    %v313 = vand.u32 %v45, 4294901760
    %v314 = vsub.f32 %v45, %v313
    %315 = vmatpush1.xpose.msra.mxu0 %v314
    %316 = vmatprep.subr.mxu0 0.0
    %v317 = vand.u32 %v46, 4294901760
    %v318 = vsub.f32 %v46, %v317
    %319 = vmatpush1.xpose.msra.mxu0 %v318
    %320 = vmatprep.subr.mxu0 0.0
    %v321 = vand.u32 %v47, 4294901760
    %v322 = vsub.f32 %v47, %v321
    %323 = vmatpush1.xpose.msra.mxu0 %v322
    %324 = vmatprep.subr.mxu0 0.0
    %v325 = vand.u32 %v48, 4294901760
    %v326 = vsub.f32 %v48, %v325
    %327 = vmatpush1.xpose.msra.mxu0 %v326
    %328 = vmatprep.subr.mxu0 0.0
    %v329 = vand.u32 %v49, 4294901760
    %v330 = vsub.f32 %v49, %v329
    %331 = vmatpush1.xpose.msra.mxu0 %v330
    %332 = vmatprep.subr.mxu0 0.0
    %v333 = vand.u32 %v50, 4294901760
    %v334 = vsub.f32 %v50, %v333
    %335 = vmatpush1.xpose.msra.mxu0 %v334
    %336 = vmatprep.subr.mxu0 0.0
    %v337 = vand.u32 %v51, 4294901760
    %v338 = vsub.f32 %v51, %v337
    %339 = vmatpush1.xpose.msra.mxu0 %v338
    %340 = vmatprep.subr.mxu0 0.0
    %v341 = vand.u32 %v52, 4294901760
    %v342 = vsub.f32 %v52, %v341
    %343 = vmatpush1.xpose.msra.mxu0 %v342
    %344 = vmatprep.subr.mxu0 0.0
    %v345 = vand.u32 %v53, 4294901760
    %v346 = vsub.f32 %v53, %v345
    %347 = vmatpush1.xpose.msra.mxu0 %v346
    %348 = vmatprep.subr.mxu0 0.0
    %v349 = vand.u32 %v54, 4294901760
    %v350 = vsub.f32 %v54, %v349
    %351 = vmatpush1.xpose.msra.mxu0 %v350
    %352 = vmatprep.subr.mxu0 0.0
    %v353 = vand.u32 %v55, 4294901760
    %v354 = vsub.f32 %v55, %v353
    %355 = vmatpush1.xpose.msra.mxu0 %v354
    %356 = vmatprep.subr.mxu0 0.0
    %v357 = vand.u32 %v56, 4294901760
    %v358 = vsub.f32 %v56, %v357
    %359 = vmatpush1.xpose.msra.mxu0 %v358
    %360 = vmatprep.subr.mxu0 0.0
    %v361 = vand.u32 %v57, 4294901760
    %v362 = vsub.f32 %v57, %v361
    %363 = vmatpush1.xpose.msra.mxu0 %v362
    %364 = vmatprep.subr.mxu0 0.0
    %365 = vmatpush1.xpose.msra.mxu0 0.0
    %366 = vmatprep.subr.mxu0 0.0
    %367 = vmatpush1.xpose.msra.mxu0 0.0
    %368 = vmatprep.subr.mxu0 0.0
    %369 = vmatpush1.xpose.msra.mxu0 0.0
    %370 = vmatprep.subr.mxu0 0.0
    %371 = vmatpush1.xpose.msra.mxu0 0.0
    %372 = vmatprep.subr.mxu0 0.0
    %373 = vmatpush1.xpose.msra.mxu0 0.0
    %374 = vmatprep.subr.mxu0 0.0
    %375 = vmatpush1.xpose.msra.mxu0 0.0
    %376 = vmatprep.subr.mxu0 0.0
    %377 = vmatpush1.xpose.msra.mxu0 0.0
    %378 = vmatprep.subr.mxu0 0.0
    %379 = vmatpush1.xpose.msra.mxu0 0.0
    %380 = vmatprep.subr.mxu0 0.0
    %381 = vmatpush1.xpose.msra.mxu0 0.0
    %382 = vmatprep.subr.mxu0 0.0
    %383 = vmatpush1.xpose.msra.mxu0 0.0
    %384 = vmatprep.subr.mxu0 0.0
    %385 = vmatpush1.xpose.msra.mxu0 0.0
    %386 = vmatprep.subr.mxu0 0.0
    %387 = vmatpush1.xpose.msra.mxu0 0.0
    %388 = vmatprep.subr.mxu0 0.0
    %389 = vmatpush1.xpose.msra.mxu0 0.0
    %390 = vmatprep.subr.mxu0 0.0
    %391 = vmatpush1.xpose.msra.mxu0 0.0
    %392 = vmatprep.subr.mxu0 0.0
    %393 = vmatpush1.xpose.msra.mxu0 0.0
    %394 = vmatprep.subr.mxu0 0.0
    %395 = vmatpush1.xpose.msra.mxu0 0.0
    %396 = vmatprep.mubr.f32.mxu0 0.0
    %v397 = vand.u32 %v41, 4294901760
    %v398 = vsub.f32 %v41, %v397
    %399 = vmatmul.mubr.f32.gmra.mrb[0].mxu0 %v398
    %v400 = vpop.f32.mrb[0].mxu0
    %v401 = vadd.f32 %v297, %v400
    %v402 = vpop.f32.mrb[0].mxu0
    %403 = vdwg.mxu0
    %404 = vmatprep.subr.mxu0 0.0
    %v405 = vand.u32 %v42, 4294901760
    %406 = vmatpush1.xpose.msra.mxu0 %v405
    %407 = vmatprep.subr.mxu0 0.0
    %v408 = vand.u32 %v43, 4294901760
    %409 = vmatpush1.xpose.msra.mxu0 %v408
    %410 = vmatprep.subr.mxu0 0.0
    %v411 = vand.u32 %v44, 4294901760
    %412 = vmatpush1.xpose.msra.mxu0 %v411
    %413 = vmatprep.subr.mxu0 0.0
    %v414 = vand.u32 %v45, 4294901760
    %415 = vmatpush1.xpose.msra.mxu0 %v414
    %416 = vmatprep.subr.mxu0 0.0
    %v417 = vand.u32 %v46, 4294901760
    %418 = vmatpush1.xpose.msra.mxu0 %v417
    %419 = vmatprep.subr.mxu0 0.0
    %v420 = vand.u32 %v47, 4294901760
    %421 = vmatpush1.xpose.msra.mxu0 %v420
    %422 = vmatprep.subr.mxu0 0.0
    %v423 = vand.u32 %v48, 4294901760
    %424 = vmatpush1.xpose.msra.mxu0 %v423
    %425 = vmatprep.subr.mxu0 0.0
    %v426 = vand.u32 %v49, 4294901760
    %427 = vmatpush1.xpose.msra.mxu0 %v426
    %428 = vmatprep.subr.mxu0 0.0
    %v429 = vand.u32 %v50, 4294901760
    %430 = vmatpush1.xpose.msra.mxu0 %v429
    %431 = vmatprep.subr.mxu0 0.0
    %v432 = vand.u32 %v51, 4294901760
    %433 = vmatpush1.xpose.msra.mxu0 %v432
    %434 = vmatprep.subr.mxu0 0.0
    %v435 = vand.u32 %v52, 4294901760
    %436 = vmatpush1.xpose.msra.mxu0 %v435
    %437 = vmatprep.subr.mxu0 0.0
    %v438 = vand.u32 %v53, 4294901760
    %439 = vmatpush1.xpose.msra.mxu0 %v438
    %440 = vmatprep.subr.mxu0 0.0
    %v441 = vand.u32 %v54, 4294901760
    %442 = vmatpush1.xpose.msra.mxu0 %v441
    %443 = vmatprep.subr.mxu0 0.0
    %v444 = vand.u32 %v55, 4294901760
    %445 = vmatpush1.xpose.msra.mxu0 %v444
    %446 = vmatprep.subr.mxu0 0.0
    %v447 = vand.u32 %v56, 4294901760
    %448 = vmatpush1.xpose.msra.mxu0 %v447
    %449 = vmatprep.subr.mxu0 0.0
    %v450 = vand.u32 %v57, 4294901760
    %451 = vmatpush1.xpose.msra.mxu0 %v450
    %452 = vmatprep.subr.mxu0 0.0
    %453 = vmatpush1.xpose.msra.mxu0 0.0
    %454 = vmatprep.subr.mxu0 0.0
    %455 = vmatpush1.xpose.msra.mxu0 0.0
    %456 = vmatprep.subr.mxu0 0.0
    %457 = vmatpush1.xpose.msra.mxu0 0.0
    %458 = vmatprep.subr.mxu0 0.0
    %459 = vmatpush1.xpose.msra.mxu0 0.0
    %460 = vmatprep.subr.mxu0 0.0
    %461 = vmatpush1.xpose.msra.mxu0 0.0
    %462 = vmatprep.subr.mxu0 0.0
    %463 = vmatpush1.xpose.msra.mxu0 0.0
    %464 = vmatprep.subr.mxu0 0.0
    %465 = vmatpush1.xpose.msra.mxu0 0.0
    %466 = vmatprep.subr.mxu0 0.0
    %467 = vmatpush1.xpose.msra.mxu0 0.0
    %468 = vmatprep.subr.mxu0 0.0
    %469 = vmatpush1.xpose.msra.mxu0 0.0
    %470 = vmatprep.subr.mxu0 0.0
    %471 = vmatpush1.xpose.msra.mxu0 0.0
    %472 = vmatprep.subr.mxu0 0.0
    %473 = vmatpush1.xpose.msra.mxu0 0.0
    %474 = vmatprep.subr.mxu0 0.0
    %475 = vmatpush1.xpose.msra.mxu0 0.0
    %476 = vmatprep.subr.mxu0 0.0
    %477 = vmatpush1.xpose.msra.mxu0 0.0
    %478 = vmatprep.subr.mxu0 0.0
    %479 = vmatpush1.xpose.msra.mxu0 0.0
    %480 = vmatprep.subr.mxu0 0.0
    %481 = vmatpush1.xpose.msra.mxu0 0.0
    %482 = vmatprep.subr.mxu0 0.0
    %483 = vmatpush1.xpose.msra.mxu0 0.0
    %484 = vmatprep.mubr.f32.mxu0 0.0
    %v485 = vand.u32 %v41, 4294901760
    %v486 = vsub.f32 %v41, %v485
    %v487 = vand.u32 %v486, 4294901760
    %488 = vmatmul.mubr.f32.gmra.mrb[0].mxu0 %v487
    %v489 = vpop.f32.mrb[0].mxu0
    %v490 = vadd.f32 %v401, %v489
    %v491 = vpop.f32.mrb[0].mxu0
    %492 = vdwg.mxu0
    %493 = vmatprep.subr.mxu0 0.0
    %v494 = vand.u32 %v42, 4294901760
    %v495 = vsub.f32 %v42, %v494
    %v496 = vand.u32 %v495, 4294901760
    %497 = vmatpush1.xpose.msra.mxu0 %v496
    %498 = vmatprep.subr.mxu0 0.0
    %v499 = vand.u32 %v43, 4294901760
    %v500 = vsub.f32 %v43, %v499
    %v501 = vand.u32 %v500, 4294901760
    %502 = vmatpush1.xpose.msra.mxu0 %v501
    %503 = vmatprep.subr.mxu0 0.0
    %v504 = vand.u32 %v44, 4294901760
    %v505 = vsub.f32 %v44, %v504
    %v506 = vand.u32 %v505, 4294901760
    %507 = vmatpush1.xpose.msra.mxu0 %v506
    %508 = vmatprep.subr.mxu0 0.0
    %v509 = vand.u32 %v45, 4294901760
    %v510 = vsub.f32 %v45, %v509
    %v511 = vand.u32 %v510, 4294901760
    %512 = vmatpush1.xpose.msra.mxu0 %v511
    %513 = vmatprep.subr.mxu0 0.0
    %v514 = vand.u32 %v46, 4294901760
    %v515 = vsub.f32 %v46, %v514
    %v516 = vand.u32 %v515, 4294901760
    %517 = vmatpush1.xpose.msra.mxu0 %v516
    %518 = vmatprep.subr.mxu0 0.0
    %v519 = vand.u32 %v47, 4294901760
    %v520 = vsub.f32 %v47, %v519
    %v521 = vand.u32 %v520, 4294901760
    %522 = vmatpush1.xpose.msra.mxu0 %v521
    %523 = vmatprep.subr.mxu0 0.0
    %v524 = vand.u32 %v48, 4294901760
    %v525 = vsub.f32 %v48, %v524
    %v526 = vand.u32 %v525, 4294901760
    %527 = vmatpush1.xpose.msra.mxu0 %v526
    %528 = vmatprep.subr.mxu0 0.0
    %v529 = vand.u32 %v49, 4294901760
    %v530 = vsub.f32 %v49, %v529
    %v531 = vand.u32 %v530, 4294901760
    %532 = vmatpush1.xpose.msra.mxu0 %v531
    %533 = vmatprep.subr.mxu0 0.0
    %v534 = vand.u32 %v50, 4294901760
    %v535 = vsub.f32 %v50, %v534
    %v536 = vand.u32 %v535, 4294901760
    %537 = vmatpush1.xpose.msra.mxu0 %v536
    %538 = vmatprep.subr.mxu0 0.0
    %v539 = vand.u32 %v51, 4294901760
    %v540 = vsub.f32 %v51, %v539
    %v541 = vand.u32 %v540, 4294901760
    %542 = vmatpush1.xpose.msra.mxu0 %v541
    %543 = vmatprep.subr.mxu0 0.0
    %v544 = vand.u32 %v52, 4294901760
    %v545 = vsub.f32 %v52, %v544
    %v546 = vand.u32 %v545, 4294901760
    %547 = vmatpush1.xpose.msra.mxu0 %v546
    %548 = vmatprep.subr.mxu0 0.0
    %v549 = vand.u32 %v53, 4294901760
    %v550 = vsub.f32 %v53, %v549
    %v551 = vand.u32 %v550, 4294901760
    %552 = vmatpush1.xpose.msra.mxu0 %v551
    %553 = vmatprep.subr.mxu0 0.0
    %v554 = vand.u32 %v54, 4294901760
    %v555 = vsub.f32 %v54, %v554
    %v556 = vand.u32 %v555, 4294901760
    %557 = vmatpush1.xpose.msra.mxu0 %v556
    %558 = vmatprep.subr.mxu0 0.0
    %v559 = vand.u32 %v55, 4294901760
    %v560 = vsub.f32 %v55, %v559
    %v561 = vand.u32 %v560, 4294901760
    %562 = vmatpush1.xpose.msra.mxu0 %v561
    %563 = vmatprep.subr.mxu0 0.0
    %v564 = vand.u32 %v56, 4294901760
    %v565 = vsub.f32 %v56, %v564
    %v566 = vand.u32 %v565, 4294901760
    %567 = vmatpush1.xpose.msra.mxu0 %v566
    %568 = vmatprep.subr.mxu0 0.0
    %v569 = vand.u32 %v57, 4294901760
    %v570 = vsub.f32 %v57, %v569
    %v571 = vand.u32 %v570, 4294901760
    %572 = vmatpush1.xpose.msra.mxu0 %v571
    %573 = vmatprep.subr.mxu0 0.0
    %574 = vmatpush1.xpose.msra.mxu0 0.0
    %575 = vmatprep.subr.mxu0 0.0
    %576 = vmatpush1.xpose.msra.mxu0 0.0
    %577 = vmatprep.subr.mxu0 0.0
    %578 = vmatpush1.xpose.msra.mxu0 0.0
    %579 = vmatprep.subr.mxu0 0.0
    %580 = vmatpush1.xpose.msra.mxu0 0.0
    %581 = vmatprep.subr.mxu0 0.0
    %582 = vmatpush1.xpose.msra.mxu0 0.0
    %583 = vmatprep.subr.mxu0 0.0
    %584 = vmatpush1.xpose.msra.mxu0 0.0
    %585 = vmatprep.subr.mxu0 0.0
    %586 = vmatpush1.xpose.msra.mxu0 0.0
    %587 = vmatprep.subr.mxu0 0.0
    %588 = vmatpush1.xpose.msra.mxu0 0.0
    %589 = vmatprep.subr.mxu0 0.0
    %590 = vmatpush1.xpose.msra.mxu0 0.0
    %591 = vmatprep.subr.mxu0 0.0
    %592 = vmatpush1.xpose.msra.mxu0 0.0
    %593 = vmatprep.subr.mxu0 0.0
    %594 = vmatpush1.xpose.msra.mxu0 0.0
    %595 = vmatprep.subr.mxu0 0.0
    %596 = vmatpush1.xpose.msra.mxu0 0.0
    %597 = vmatprep.subr.mxu0 0.0
    %598 = vmatpush1.xpose.msra.mxu0 0.0
    %599 = vmatprep.subr.mxu0 0.0
    %600 = vmatpush1.xpose.msra.mxu0 0.0
    %601 = vmatprep.subr.mxu0 0.0
    %602 = vmatpush1.xpose.msra.mxu0 0.0
    %603 = vmatprep.subr.mxu0 0.0
    %604 = vmatpush1.xpose.msra.mxu0 0.0
    %605 = vmatprep.mubr.f32.mxu0 0.0
    %v606 = vand.u32 %v41, 4294901760
    %607 = vmatmul.mubr.f32.gmra.mrb[0].mxu0 %v606
    %v608 = vpop.f32.mrb[0].mxu0
    %v609 = vadd.f32 %v490, %v608
    %v610 = vpop.f32.mrb[0].mxu0
    %611 = vdwg.mxu0
    %612 = vmatprep.subr.mxu0 0.0
    %v613 = vand.u32 %v42, 4294901760
    %614 = vmatpush1.xpose.msra.mxu0 %v613
    %615 = vmatprep.subr.mxu0 0.0
    %v616 = vand.u32 %v43, 4294901760
    %617 = vmatpush1.xpose.msra.mxu0 %v616
    %618 = vmatprep.subr.mxu0 0.0
    %v619 = vand.u32 %v44, 4294901760
    %620 = vmatpush1.xpose.msra.mxu0 %v619
    %621 = vmatprep.subr.mxu0 0.0
    %v622 = vand.u32 %v45, 4294901760
    %623 = vmatpush1.xpose.msra.mxu0 %v622
    %624 = vmatprep.subr.mxu0 0.0
    %v625 = vand.u32 %v46, 4294901760
    %626 = vmatpush1.xpose.msra.mxu0 %v625
    %627 = vmatprep.subr.mxu0 0.0
    %v628 = vand.u32 %v47, 4294901760
    %629 = vmatpush1.xpose.msra.mxu0 %v628
    %630 = vmatprep.subr.mxu0 0.0
    %v631 = vand.u32 %v48, 4294901760
    %632 = vmatpush1.xpose.msra.mxu0 %v631
    %633 = vmatprep.subr.mxu0 0.0
    %v634 = vand.u32 %v49, 4294901760
    %635 = vmatpush1.xpose.msra.mxu0 %v634
    %636 = vmatprep.subr.mxu0 0.0
    %v637 = vand.u32 %v50, 4294901760
    %638 = vmatpush1.xpose.msra.mxu0 %v637
    %639 = vmatprep.subr.mxu0 0.0
    %v640 = vand.u32 %v51, 4294901760
    %641 = vmatpush1.xpose.msra.mxu0 %v640
    %642 = vmatprep.subr.mxu0 0.0
    %v643 = vand.u32 %v52, 4294901760
    %644 = vmatpush1.xpose.msra.mxu0 %v643
    %645 = vmatprep.subr.mxu0 0.0
    %v646 = vand.u32 %v53, 4294901760
    %647 = vmatpush1.xpose.msra.mxu0 %v646
    %648 = vmatprep.subr.mxu0 0.0
    %v649 = vand.u32 %v54, 4294901760
    %650 = vmatpush1.xpose.msra.mxu0 %v649
    %651 = vmatprep.subr.mxu0 0.0
    %v652 = vand.u32 %v55, 4294901760
    %653 = vmatpush1.xpose.msra.mxu0 %v652
    %654 = vmatprep.subr.mxu0 0.0
    %v655 = vand.u32 %v56, 4294901760
    %656 = vmatpush1.xpose.msra.mxu0 %v655
    %657 = vmatprep.subr.mxu0 0.0
    %v658 = vand.u32 %v57, 4294901760
    %659 = vmatpush1.xpose.msra.mxu0 %v658
    %660 = vmatprep.subr.mxu0 0.0
    %661 = vmatpush1.xpose.msra.mxu0 0.0
    %662 = vmatprep.subr.mxu0 0.0
    %663 = vmatpush1.xpose.msra.mxu0 0.0
    %664 = vmatprep.subr.mxu0 0.0
    %665 = vmatpush1.xpose.msra.mxu0 0.0
    %666 = vmatprep.subr.mxu0 0.0
    %667 = vmatpush1.xpose.msra.mxu0 0.0
    %668 = vmatprep.subr.mxu0 0.0
    %669 = vmatpush1.xpose.msra.mxu0 0.0
    %670 = vmatprep.subr.mxu0 0.0
    %671 = vmatpush1.xpose.msra.mxu0 0.0
    %672 = vmatprep.subr.mxu0 0.0
    %673 = vmatpush1.xpose.msra.mxu0 0.0
    %674 = vmatprep.subr.mxu0 0.0
    %675 = vmatpush1.xpose.msra.mxu0 0.0
    %676 = vmatprep.subr.mxu0 0.0
    %677 = vmatpush1.xpose.msra.mxu0 0.0
    %678 = vmatprep.subr.mxu0 0.0
    %679 = vmatpush1.xpose.msra.mxu0 0.0
    %680 = vmatprep.subr.mxu0 0.0
    %681 = vmatpush1.xpose.msra.mxu0 0.0
    %682 = vmatprep.subr.mxu0 0.0
    %683 = vmatpush1.xpose.msra.mxu0 0.0
    %684 = vmatprep.subr.mxu0 0.0
    %685 = vmatpush1.xpose.msra.mxu0 0.0
    %686 = vmatprep.subr.mxu0 0.0
    %687 = vmatpush1.xpose.msra.mxu0 0.0
    %688 = vmatprep.subr.mxu0 0.0
    %689 = vmatpush1.xpose.msra.mxu0 0.0
    %690 = vmatprep.subr.mxu0 0.0
    %691 = vmatpush1.xpose.msra.mxu0 0.0
    %692 = vmatprep.mubr.f32.mxu0 0.0
    %v693 = vand.u32 %v41, 4294901760
    %694 = vmatmul.mubr.f32.gmra.mrb[0].mxu0 %v693
    %v695 = vpop.f32.mrb[0].mxu0
    %v696 = vadd.f32 %v609, %v695
    %v697 = vpop.f32.mrb[0].mxu0
    %698 = vdwg.mxu0
    %v699 = vmul.f32 %v696, 0.0017677669
    %v700 = vld [vmem:[%s2] sm:$0x1]
    %v701 = vmul.f32 %v700, 0.01
    %v703 = vlaneseq
    %v704 = vshrl.u32 %v703, 7
    %v705 = vsub.s32 0, %v704
    %v706 = vrot.slane %v701, %v705
    %v708 = vadd.f32 %v699, %v706
    %709 = vst [vmem:[#allocation7] sm:$0xff] %v708
    // Predicated region
    $region22: #{tpu_custom_call.1} parent=1 // pred_check
      _
    $region23: #{tpu_custom_call.1} parent=1 // pred_check_branch
      %711 = sbr.rel (0) target = $region25
    $region24: #{tpu_custom_call.1} parent=1 // pred_region
      %s713 = ssub.s32 128, 128
      %714 = vsyncadd [#allocation4], %s713
      %s716 = sshll.u32 [#allocation7], 4
      %s717 = int_to_ptr.vmem [resolvable:$true] %s716
      %719 = dma.vmem_to_hbm [thread:$0]  %s717, 128, %s3, [#allocation4]
    $region25: #{tpu_custom_call.1} parent=1 // pred_fallthru
      _
    // Predicated region
    $region26: #{tpu_custom_call.1} parent=1 // pred_check
      _
    $region27: #{tpu_custom_call.1} parent=1 // pred_check_branch
      %721 = sbr.rel (0) target = $region29
    $region28: #{tpu_custom_call.1} parent=1 // pred_region
      %722 = dma.done [#allocation4], 128
    $region29: #{tpu_custom_call.1} parent=1 // pred_fallthru
      _
    %723 = vsyncpa [#allocation3], 1
    %724 = vsyncpa [#allocation6], 1
    %725 = vsyncpa [#allocation4], 1

</llo_original>
